<compile_context>
chip_gen: v7x
topology: tpu7x:2x2x1
jax: 0.10.0
libtpu: 0.0.40
codegen_flags: <defaults>
</compile_context>

<pallas_src>
import math

import jax
import jax.numpy as jnp
from jax.experimental import pallas as pl
from jax.experimental.pallas import tpu as pltpu


def _tile_budget_bytes():
    """Per-block input budget, generation aware (double buffering is accounted
    for separately via vmem_limit_bytes)."""
    try:
        kind = jax.devices()[0].device_kind.lower()
    except Exception:
        kind = ""
    if "v5" in kind:
        return 6 << 20          # v5e: ~0.8 TB/s HBM, keep tiles modest
    return 12 << 20             # v6e / v7x (and unknown): big lane-dense tiles


def _tile_params(N, C, HW, itemsize, budget):
    """Returns (BN, TS): images per block and spatial tile size (lanes)."""
    per_image = C * HW * itemsize
    if per_image <= budget:
        # One spatial tile covers the image -> block several images per step.
        bn = max(1, min(N, 512, budget // max(1, per_image)))
        return bn, HW
    if HW <= 128:
        return 1, HW
    ts = max(128, ((budget // (C * itemsize)) // 128) * 128)   # multiple of 128
    return 1, ts


def _make_eca_kernel(BN, C, HW, TS, k, pad):
    needs_mask = (HW % TS) != 0
    inv_hw = 1.0 / float(HW)

    def kernel(w_ref, x_ref, o_ref, acc_ref):
        # w_ref:   (k,)          SMEM  conv1d taps (f32)
        # x_ref:   (BN, C, TS)   VMEM  block of x viewed as (N, C, H*W)
        # o_ref:   (BN, 1, C)    VMEM  lane-dense sigmoid attention weights
        # acc_ref: (BN, C)       VMEM  f32 running spatial sums
        s = pl.program_id(1)
        last = pl.num_programs(1) - 1

        @pl.when(s == 0)
        def _init():
            acc_ref[...] = jnp.zeros_like(acc_ref)

        if needs_mask:
            # Steady state: pure load + add -> stays on the HBM roofline.
            @pl.when(s < last)
            def _steady():
                xb = x_ref[...].astype(jnp.float32)
                acc_ref[...] += jnp.sum(xb, axis=2)

            # Only the final (partial) tile pays for iota/compare/select.
            @pl.when(s == last)
            def _tail():
                xb = x_ref[...].astype(jnp.float32)
                col = jax.lax.broadcasted_iota(jnp.int32, xb.shape, 2)
                xb = jnp.where(s * TS + col < HW, xb, 0.0)
                acc_ref[...] += jnp.sum(xb, axis=2)
        else:
            xb = x_ref[...].astype(jnp.float32)
            acc_ref[...] += jnp.sum(xb, axis=2)

        @pl.when(s == last)
        def _finish():
            y = acc_ref[...] * inv_hw                        # (BN, C) means
            # Zero-padded k-tap channel conv as a banded (C, C) matrix:
            #   M[j, c] = w[j - c + pad]  if 0 <= j - c + pad < k  else 0
            # so z = y @ M reproduces PyTorch Conv1d's cross-correlation.
            row = jax.lax.broadcasted_iota(jnp.int32, (C, C), 0)
            col = jax.lax.broadcasted_iota(jnp.int32, (C, C), 1)
            diff = row - col + pad
            m = jnp.zeros((C, C), jnp.float32)
            for t in range(k):                               # k is tiny & static
                m = m + jnp.where(diff == t, w_ref[t], 0.0)
            z = jnp.dot(y, m, preferred_element_type=jnp.float32)   # (BN, C)
            zs = jax.nn.sigmoid(z).astype(o_ref.dtype)
            o_ref[...] = zs[:, None, :]                      # (BN, 1, C) lane-dense

    return kernel


def eca_forward(x_nchw, w1d, *, tile_budget_bytes=None):
    """x_nchw: (N, C, H, W); w1d: (k,) conv1d weight (PyTorch (1,1,k) flattened)."""
    N, C, H, W = x_nchw.shape
    w = jnp.asarray(w1d, jnp.float32).reshape(-1)
    k = int(w.shape[0])
    pad = k // 2
    HW = H * W
    itemsize = jnp.dtype(x_nchw.dtype).itemsize

    budget = tile_budget_bytes if tile_budget_bytes is not None else _tile_budget_bytes()
    BN, TS = _tile_params(N, C, HW, itemsize, budget)
    grid = (pl.cdiv(N, BN), pl.cdiv(HW, TS))

    # Explicit scoped-VMEM limit: double-buffered input block + (padded)
    # double-buffered output block + headroom; well under physical VMEM on
    # v5e/v6e (128 MiB) and v7x (64 MiB).
    in_block_bytes = BN * C * TS * itemsize
    out_block_bytes = BN * 8 * 128 * itemsize        # (1, C) tiles pad to (8, 128)
    vmem_limit = int(min(max(2 * (in_block_bytes + out_block_bytes) + (8 << 20),
                             16 << 20), 48 << 20))

    kernel = _make_eca_kernel(BN, C, HW, TS, k, pad)

    out = pl.pallas_call(
        kernel,
        out_shape=jax.ShapeDtypeStruct((N, 1, C), x_nchw.dtype),
        grid_spec=pltpu.PrefetchScalarGridSpec(
            num_scalar_prefetch=0,
            grid=grid,
            in_specs=[
                pl.BlockSpec(memory_space=pltpu.MemorySpace.SMEM),     # conv taps
                pl.BlockSpec((BN, C, TS), lambda n, s: (n, 0, s)),     # x block
            ],
            out_specs=pl.BlockSpec((BN, 1, C), lambda n, s: (n, 0, 0)),
            scratch_shapes=[pltpu.VMEM((BN, C), jnp.float32)],
        ),
        compiler_params=pltpu.CompilerParams(
            dimension_semantics=("parallel", "arbitrary"),
            vmem_limit_bytes=vmem_limit),
    )(w, x_nchw.reshape(N, C, HW))

    return out.reshape(N, C, 1, 1)


def eca_reference(x, w1d):
    """Pure-JAX reference of the PyTorch ECA forward."""
    N, C, H, W = x.shape
    k = int(w1d.shape[0])
    pad = k // 2
    y = jnp.mean(x.astype(jnp.float32), axis=(2, 3))            # (N, C)
    yp = jnp.pad(y, ((0, 0), (pad, pad)))
    z = jnp.zeros_like(y)
    for t in range(k):                                          # cross-correlation
        z = z + w1d[t] * yp[:, t:t + C]
    return jax.nn.sigmoid(z).reshape(N, C, 1, 1).astype(x.dtype)


if __name__ == "__main__":
    key = jax.random.PRNGKey(0)
    k_x, k_w, k_x2 = jax.random.split(key, 3)

    # Small shapes consistent with the module; C=16 -> ECA kernel size k=3.
    N, C, H, W = 2, 16, 16, 16
    b, gamma = 1, 2
    t = int(abs((math.log(C, 2) + b) / gamma))
    kk = t if t % 2 else t + 1          # PyTorch module's kernel-size rule (= 3)

    x = jax.random.normal(k_x, (N, C, H, W), dtype=jnp.float32)
    w1d = jax.random.normal(k_w, (kk,), dtype=jnp.float32) * (1.0 / kk) ** 0.5

    # Path 1: batch-blocked, single spatial tile per image (typical ECA sizes).
    out = eca_forward(x, w1d)
    jax.block_until_ready(out)
    ref = eca_reference(x, w1d)
    assert out.shape == (N, C, 1, 1)
    assert jnp.allclose(out, ref, atol=1e-5, rtol=1e-5)

    # Path 2: force a tiny tile budget to exercise the multi-tile reduction
    # with the masked last tile (HW=400 -> TS=128, 4 spatial tiles).
    x2 = jax.random.normal(k_x2, (N, C, 20, 20), dtype=jnp.float32)
    out2 = eca_forward(x2, w1d, tile_budget_bytes=C * 128 * 4)
    jax.block_until_ready(out2)
    ref2 = eca_reference(x2, w1d)
    assert jnp.allclose(out2, ref2, atol=1e-5, rtol=1e-5)

    print("KERNEL_OK")
</pallas_src>

<mosaic_0001>
module attributes {stable_mosaic.version = 11 : i64} {
  func.func @kernel(%arg0: i32, %arg1: i32, %arg2: memref<3xf32, #tpu.memory_space<smem>>, %arg3: memref<2x16x256xf32, #tpu.memory_space<vmem>>, %arg4: memref<2x1x16xf32, #tpu.memory_space<vmem>>, %arg5: memref<2x16xf32, #tpu.memory_space<vmem>>) attributes {dimension_semantics = [#tpu.dimension_semantics<parallel>, #tpu.dimension_semantics<arbitrary>], iteration_bounds = array<i64: 1, 1>, scalar_prefetch = 0 : i64, scratch_operands = 1 : i64, tpu.core_type = #tpu.core_type<tc>, window_params = [{transform_indices = @transform_0, window_bounds = array<i64: 3>}, {transform_indices = @transform_1, window_bounds = array<i64: 2, 16, 256>}, {transform_indices = @transform_2, window_bounds = array<i64: 2, 1, 16>}]} {
    %c0_i32 = arith.constant 0 : i32
    %0 = arith.cmpi eq, %arg1, %c0_i32 : i32
    %1 = arith.extui %0 : i1 to i32
    %c0_i32_0 = arith.constant 0 : i32
    %2 = arith.cmpi ne, %1, %c0_i32_0 : i32
    scf.if %2 {
      %cst_9 = arith.constant 0.000000e+00 : f32
      %11 = vector.broadcast %cst_9 : f32 to vector<2x16xf32>
      %c0_10 = arith.constant 0 : index
      %c0_11 = arith.constant 0 : index
      %12 = vector.load %arg5[%c0_10, %c0_11] : memref<2x16xf32, #tpu.memory_space<vmem>>, vector<2x16xf32>
      tpu.vector_store %arg5[%c0_10, %c0_11], %11 {strides = array<i32>} : memref<2x16xf32, #tpu.memory_space<vmem>>, vector<2x16xf32>,
    } else {
    }
    %c0 = arith.constant 0 : index
    %c0_1 = arith.constant 0 : index
    %c0_2 = arith.constant 0 : index
    %3 = vector.load %arg3[%c0, %c0_1, %c0_2] : memref<2x16x256xf32, #tpu.memory_space<vmem>>, vector<2x16x256xf32>
    %c0_3 = arith.constant 0 : index
    %c0_4 = arith.constant 0 : index
    %4 = vector.load %arg5[%c0_3, %c0_4] : memref<2x16xf32, #tpu.memory_space<vmem>>, vector<2x16xf32>
    %cst = arith.constant dense<0.000000e+00> : vector<2x16xf32>
    %5 = vector.multi_reduction <add>, %3, %cst [2] : vector<2x16x256xf32> to vector<2x16xf32>
    %6 = arith.addf %4, %5 : vector<2x16xf32>
    %c0_5 = arith.constant 0 : index
    %c0_6 = arith.constant 0 : index
    %7 = vector.load %arg5[%c0_5, %c0_6] : memref<2x16xf32, #tpu.memory_space<vmem>>, vector<2x16xf32>
    tpu.vector_store %arg5[%c0_5, %c0_6], %6 {strides = array<i32>} : memref<2x16xf32, #tpu.memory_space<vmem>>, vector<2x16xf32>,
    %c0_i32_7 = arith.constant 0 : i32
    %8 = arith.cmpi eq, %arg1, %c0_i32_7 : i32
    %9 = arith.extui %8 : i1 to i32
    %c0_i32_8 = arith.constant 0 : i32
    %10 = arith.cmpi ne, %9, %c0_i32_8 : i32
    scf.if %10 {
      %c0_9 = arith.constant 0 : index
      %c0_10 = arith.constant 0 : index
      %11 = vector.load %arg5[%c0_9, %c0_10] : memref<2x16xf32, #tpu.memory_space<vmem>>, vector<2x16xf32>
      %cst_11 = arith.constant 3.906250e-03 : f32
      %12 = vector.broadcast %cst_11 : f32 to vector<2x16xf32>
      %13 = arith.mulf %11, %12 : vector<2x16xf32>
      %14 = tpu.iota {dimensions = array<i32: 0>} : vector<16x16xi32>
      %15 = tpu.iota {dimensions = array<i32: 1>} : vector<16x16xi32>
      %16 = arith.subi %14, %15 : vector<16x16xi32>
      %c1_i32 = arith.constant 1 : i32
      %17 = vector.broadcast %c1_i32 : i32 to vector<16x16xi32>
      %18 = arith.addi %16, %17 : vector<16x16xi32>
      %cst_12 = arith.constant 0.000000e+00 : f32
      %19 = vector.broadcast %cst_12 : f32 to vector<16x16xf32>
      %c0_i32_13 = arith.constant 0 : i32
      %20 = vector.broadcast %c0_i32_13 : i32 to vector<16x16xi32>
      %21 = arith.cmpi eq, %18, %20 : vector<16x16xi32>
      %c0_14 = arith.constant 0 : index
      %22 = memref.load %arg2[%c0_14] : memref<3xf32, #tpu.memory_space<smem>>
      %cst_15 = arith.constant 0.000000e+00 : f32
      %23 = vector.broadcast %22 : f32 to vector<16x16xf32>
      %24 = vector.broadcast %cst_15 : f32 to vector<16x16xf32>
      %25 = arith.select %21, %23, %24 : vector<16x16xi1>, vector<16x16xf32>
      %26 = arith.addf %19, %25 : vector<16x16xf32>
      %c1_i32_16 = arith.constant 1 : i32
      %27 = vector.broadcast %c1_i32_16 : i32 to vector<16x16xi32>
      %28 = arith.cmpi eq, %18, %27 : vector<16x16xi32>
      %c1 = arith.constant 1 : index
      %29 = memref.load %arg2[%c1] : memref<3xf32, #tpu.memory_space<smem>>
      %cst_17 = arith.constant 0.000000e+00 : f32
      %30 = vector.broadcast %29 : f32 to vector<16x16xf32>
      %31 = vector.broadcast %cst_17 : f32 to vector<16x16xf32>
      %32 = arith.select %28, %30, %31 : vector<16x16xi1>, vector<16x16xf32>
      %33 = arith.addf %26, %32 : vector<16x16xf32>
      %c2_i32 = arith.constant 2 : i32
      %34 = vector.broadcast %c2_i32 : i32 to vector<16x16xi32>
      %35 = arith.cmpi eq, %18, %34 : vector<16x16xi32>
      %c2 = arith.constant 2 : index
      %36 = memref.load %arg2[%c2] : memref<3xf32, #tpu.memory_space<smem>>
      %cst_18 = arith.constant 0.000000e+00 : f32
      %37 = vector.broadcast %36 : f32 to vector<16x16xf32>
      %38 = vector.broadcast %cst_18 : f32 to vector<16x16xf32>
      %39 = arith.select %35, %37, %38 : vector<16x16xi1>, vector<16x16xf32>
      %40 = arith.addf %33, %39 : vector<16x16xf32>
      %cst_19 = arith.constant dense<0.000000e+00> : vector<2x16xf32>
      %41 = tpu.matmul %13, %40, %cst_19 {dimension_numbers = #tpu.dot_dimension_numbers<[1], [0], [0], [1], [0, 0, 1, 1], [], []>} : vector<2x16xf32>, vector<16x16xf32>, vector<2x16xf32> -> vector<2x16xf32>
      %42 = arith.negf %41 : vector<2x16xf32>
      %43 = math.exp %42 : vector<2x16xf32>
      %cst_20 = arith.constant 1.000000e+00 : f32
      %44 = vector.broadcast %cst_20 : f32 to vector<2x16xf32>
      %45 = arith.addf %44, %43 : vector<2x16xf32>
      %46 = arith.divf %44, %45 : vector<2x16xf32>
      %47 = vector.shape_cast %46 : vector<2x16xf32> to vector<2x1x16xf32>
      %c0_21 = arith.constant 0 : index
      %c0_22 = arith.constant 0 : index
      %c0_23 = arith.constant 0 : index
      %48 = vector.load %arg4[%c0_21, %c0_22, %c0_23] : memref<2x1x16xf32, #tpu.memory_space<vmem>>, vector<2x1x16xf32>
      tpu.vector_store %arg4[%c0_21, %c0_22, %c0_23], %47 {strides = array<i32>} : memref<2x1x16xf32, #tpu.memory_space<vmem>>, vector<2x1x16xf32>,
    } else {
    }
    return
  }
  func.func @transform_0(%arg0: i32, %arg1: i32) -> i32 {
    %c0_i32 = arith.constant 0 : i32
    %c0_i32_0 = arith.constant 0 : i32
    return %c0_i32 : i32
  }
  func.func @transform_1(%arg0: i32, %arg1: i32) -> (i32, i32, i32) {
    %c0_i32 = arith.constant 0 : i32
    %c0_i32_0 = arith.constant 0 : i32
    return %arg0, %c0_i32, %arg1 : i32, i32, i32
  }
  func.func @transform_2(%arg0: i32, %arg1: i32) -> (i32, i32, i32) {
    %c0_i32 = arith.constant 0 : i32
    %c0_i32_0 = arith.constant 0 : i32
    %c0_i32_1 = arith.constant 0 : i32
    return %arg0, %c0_i32, %c0_i32_0 : i32, i32, i32
  }
}

</mosaic_0001>

<llo_original>
// kernel: tpu_custom_call.1
$region0: #{tpu_custom_call.1}
  #allocation0 [shape = 'u32[]', space=smem, size = 0x4, offset = 0x4, fixed_abs, tag = 'smem constant byte address 0x4 - core index']
  #allocation1 [shape = 'u32[144,128]{1,0:T(1,128)}', space=vmem, size = 0x12000, scoped, tag = 'internal scratch']
  #allocation2 [shape = 'f32[2,16]{1,0:T(2,128)}', space=vmem, size = 0x400, scoped, tag = 'scratch operand']
  %s0 = inlined_call_operand.hbm [shape: f32[3], index: 0, kind: input, shape index: {}]
  %s1 = inlined_call_operand.hbm [shape: f32[2,16,256], index: 1, kind: input, shape index: {}]
  %s2 = inlined_call_operand.hbm [shape: f32[2,1,16], index: 2, kind: output, shape index: {}]
  %s3 = sld [smem:[#allocation0]]
  $region34: #{tpu_custom_call.1} parent=0
    _
  %s5 = ssub.s32 1, %s3
  %s6 = scalar_select 0, %s5, %s3
  $region1: #{tpu_custom_call.1} parent=0
    #allocation3 [shape = 'u8[512]{0}', space=smem, size = 0x200, scoped, tag = 'input window, operand 0, single buffered']
    #allocation4 [shape = 's32[1]{0}', space=sflag, size = 0x4, scoped, tag = 'scoped memory for tpu_custom_call.1']
    #allocation5 [shape = 's32[1]{0}', space=sflag, size = 0x4, scoped, tag = 'scoped memory for tpu_custom_call.1']
    #allocation6 [shape = 's32[1]{0}', space=sflag, size = 0x4, scoped, tag = 'scoped memory for tpu_custom_call.1']
    #allocation7 [shape = 'u8[32768]{0}', space=vmem, size = 0x8000, scoped, tag = 'input window, operand 1, single buffered']
    #allocation8 [shape = 'u8[1024]{0}', space=vmem, size = 0x400, scoped, tag = 'output window, operand 0, single buffered']
    %7 = vsyncpa [#allocation6], 0
    %8 = vsyncpa [#allocation4], 0
    %9 = vsyncpa [#allocation5], 0
    // Predicated region
    $region2: #{tpu_custom_call.1} parent=1 // pred_check
      _
    $region3: #{tpu_custom_call.1} parent=1 // pred_check_branch
      %11 = sbr.rel (0) target = $region5
    $region4: #{tpu_custom_call.1} parent=1 // pred_region
      %s13 = ssub.s32 16, 16
      %14 = vsyncadd [#allocation6], %s13
      %17 = dma.hbm_to_smem %s0, 16, [#allocation3], [#allocation6]
    $region5: #{tpu_custom_call.1} parent=1 // pred_fallthru
      _
    // Predicated region
    $region6: #{tpu_custom_call.1} parent=1 // pred_check
      _
    $region7: #{tpu_custom_call.1} parent=1 // pred_check_branch
      %19 = sbr.rel (0) target = $region9
    $region8: #{tpu_custom_call.1} parent=1 // pred_region
      %s21 = ssub.s32 1024, 1024
      %22 = vsyncadd [#allocation4], %s21
      %s23 = sshll.u32 [#allocation7], 4
      %s24 = int_to_ptr.vmem [resolvable:$true] %s23
      %29 = dma.hbm_to_vmem [thread:$0]  %s1, 1024, %s24, [#allocation4], 256, 256, 16
    $region9: #{tpu_custom_call.1} parent=1 // pred_fallthru
      _
    // Predicated region
    $region10: #{tpu_custom_call.1} parent=1 // pred_check
      _
    $region11: #{tpu_custom_call.1} parent=1 // pred_check_branch
      %31 = sbr.rel (0) target = $region13
    $region12: #{tpu_custom_call.1} parent=1 // pred_region
      %32 = dma.done [#allocation6], 16
    $region13: #{tpu_custom_call.1} parent=1 // pred_fallthru
      _
    // Predicated region
    $region14: #{tpu_custom_call.1} parent=1 // pred_check
      _
    $region15: #{tpu_custom_call.1} parent=1 // pred_check_branch
      %34 = sbr.rel (0) target = $region17
    $region16: #{tpu_custom_call.1} parent=1 // pred_region
      %35 = dma.done [#allocation4], 1024
    $region17: #{tpu_custom_call.1} parent=1 // pred_fallthru
      _
    %36 = sfence
    %p37 = scmp.eq.s32.totalorder 0, 0
    // Predicated region
    $region18: #{tpu_custom_call.1} parent=1 // pred_check
      %p38 = pneg %p37
    $region19: #{tpu_custom_call.1} parent=1 // pred_check_branch
      %40 = sbr.rel (%p38) target = $region21
    $region20: #{tpu_custom_call.1} parent=1 // pred_region
      %vm41 = vcmask 123904
      %42 = vst.msk [vmem:[#allocation2] sm:$0x3] %vm41, 0.0
    $region21: #{tpu_custom_call.1} parent=1 // pred_fallthru
      _
    %v43 = vld [vmem:[#allocation7] sm:$0xff]
    %v44 = vld [vmem:[#allocation7 + $0x8] sm:$0xff]
    %v45 = vld [vmem:[#allocation7 + $0x10] sm:$0xff]
    %v46 = vld [vmem:[#allocation7 + $0x18] sm:$0xff]
    %v47 = vld [vmem:[#allocation7 + $0x20] sm:$0xff]
    %v48 = vld [vmem:[#allocation7 + $0x28] sm:$0xff]
    %v49 = vld [vmem:[#allocation7 + $0x30] sm:$0xff]
    %v50 = vld [vmem:[#allocation7 + $0x38] sm:$0xff]
    %v51 = vld [vmem:[#allocation2] sm:$0x3]
    %v52 = vadd.f32 %v43, %v44
    %53 = vadd.xlane.f32.xlu0 %v52
    %v54 = vpop.xlane.xlu0 %53
    %v55 = vadd.f32 %v45, %v46
    %56 = vadd.xlane.f32.xlu0 %v55
    %v57 = vpop.xlane.xlu0 %56
    %v58 = vadd.f32 %v47, %v48
    %59 = vadd.xlane.f32.xlu0 %v58
    %v60 = vpop.xlane.xlu0 %59
    %v61 = vadd.f32 %v49, %v50
    %62 = vadd.xlane.f32.xlu0 %v61
    %v63 = vpop.xlane.xlu0 %62
    %v68 = vlaneseq
    %v69 = vand.u32 %v68, 127
    %v70 = vlaneseq
    %v71 = vshrl.u32 %v70, 7
    %v72 = vsub.s32 %v69, %v71
    %v73 = vrot.slane %v54, %v72
    %v74 = vadd.s32 %v69, 4294967288
    %v75 = vlaneseq
    %v76 = vshrl.u32 %v75, 7
    %v77 = vsub.s32 %v74, %v76
    %v78 = vrot.slane %v57, %v77
    %vm79 = vcmask 130112
    %v80 = vsel %vm79, %v78, %v73
    %v81 = vlaneseq
    %v82 = vshrl.u32 %v81, 7
    %v83 = vsub.s32 %v69, %v82
    %v84 = vrot.slane %v60, %v83
    %v85 = vlaneseq
    %v86 = vshrl.u32 %v85, 7
    %v87 = vsub.s32 %v74, %v86
    %v88 = vrot.slane %v63, %v87
    %v89 = vsel %vm79, %v88, %v84
    %vm90 = vcmask 1041409
    %v91 = vsel %vm90, %v89, %v80
    %v93 = vadd.f32 %v51, %v91
    %vm94 = vcmask 123904
    %95 = vst.msk [vmem:[#allocation2] sm:$0x3] %vm94, %v93
    // Predicated region
    $region22: #{tpu_custom_call.1} parent=1 // pred_check
      %p96 = pneg %p37
    $region23: #{tpu_custom_call.1} parent=1 // pred_check_branch
      %98 = sbr.rel (%p96) target = $region25
    $region24: #{tpu_custom_call.1} parent=1 // pred_region
      %v99 = vld [vmem:[#allocation2] sm:$0x3]
      %v100 = vmul.f32 %v99, 0.00390625
      %v101 = vlaneseq
      %v102 = vshrl.u32 %v101, 7
      %v103 = vadd.s32 %v102, 8
      %v104 = vsub.s32 %v102, %v69
      %v105 = vsub.s32 %v103, %v69
      %v106 = vadd.s32 %v104, 1
      %v107 = vadd.s32 %v105, 1
      %vm108 = vcmp.eq.s32.totalorder %v106, 0
      %vm109 = vcmp.eq.s32.totalorder %v107, 0
      %s110 = sld [smem:[#allocation3]]
      %v111 = vstv %s110
      %v112 = vsel %vm108, %v111, 0.0
      %v113 = vsel %vm109, %v111, 0.0
      %v114 = vadd.f32 %v112, 0.0
      %v115 = vadd.f32 %v113, 0.0
      %vm116 = vcmp.eq.s32.totalorder %v106, 1
      %vm117 = vcmp.eq.s32.totalorder %v107, 1
      %s118 = sld [smem:[#allocation3 + $0x1]]
      %v119 = vstv %s118
      %v120 = vsel %vm116, %v119, 0.0
      %v121 = vsel %vm117, %v119, 0.0
      %v122 = vadd.f32 %v114, %v120
      %v123 = vadd.f32 %v115, %v121
      %vm124 = vcmp.eq.s32.totalorder %v106, 2
      %vm125 = vcmp.eq.s32.totalorder %v107, 2
      %s126 = sld [smem:[#allocation3 + $0x2]]
      %v127 = vstv %s126
      %v128 = vsel %vm124, %v127, 0.0
      %v129 = vsel %vm125, %v127, 0.0
      %v130 = vadd.f32 %v122, %v128
      %v131 = vadd.f32 %v123, %v129
      %vm132 = vcmask 130048
      %v134 = vsel %vm132, %v100, 0
      %136 = vmatprep.subr.mxu0 0.0
      %137 = vmatpush1.msra.mxu0 %v130
      %138 = vmatprep.subr.mxu0 0.0
      %139 = vmatpush1.msra.mxu0 %v131
      %140 = vmatprep.subr.mxu0 0.0
      %141 = vmatpush1.msra.mxu0 0.0
      %142 = vmatprep.subr.mxu0 0.0
      %143 = vmatpush1.msra.mxu0 0.0
      %144 = vmatprep.subr.mxu0 0.0
      %145 = vmatpush1.msra.mxu0 0.0
      %146 = vmatprep.subr.mxu0 0.0
      %147 = vmatpush1.msra.mxu0 0.0
      %148 = vmatprep.subr.mxu0 0.0
      %149 = vmatpush1.msra.mxu0 0.0
      %150 = vmatprep.subr.mxu0 0.0
      %151 = vmatpush1.msra.mxu0 0.0
      %152 = vmatprep.subr.mxu0 0.0
      %153 = vmatpush1.msra.mxu0 0.0
      %154 = vmatprep.subr.mxu0 0.0
      %155 = vmatpush1.msra.mxu0 0.0
      %156 = vmatprep.subr.mxu0 0.0
      %157 = vmatpush1.msra.mxu0 0.0
      %158 = vmatprep.subr.mxu0 0.0
      %159 = vmatpush1.msra.mxu0 0.0
      %160 = vmatprep.subr.mxu0 0.0
      %161 = vmatpush1.msra.mxu0 0.0
      %162 = vmatprep.subr.mxu0 0.0
      %163 = vmatpush1.msra.mxu0 0.0
      %164 = vmatprep.subr.mxu0 0.0
      %165 = vmatpush1.msra.mxu0 0.0
      %166 = vmatprep.subr.mxu0 0.0
      %167 = vmatpush1.msra.mxu0 0.0
      %168 = vmatprep.subr.mxu0 0.0
      %169 = vmatpush1.msra.mxu0 0.0
      %170 = vmatprep.subr.mxu0 0.0
      %171 = vmatpush1.msra.mxu0 0.0
      %172 = vmatprep.subr.mxu0 0.0
      %173 = vmatpush1.msra.mxu0 0.0
      %174 = vmatprep.subr.mxu0 0.0
      %175 = vmatpush1.msra.mxu0 0.0
      %176 = vmatprep.subr.mxu0 0.0
      %177 = vmatpush1.msra.mxu0 0.0
      %178 = vmatprep.subr.mxu0 0.0
      %179 = vmatpush1.msra.mxu0 0.0
      %180 = vmatprep.subr.mxu0 0.0
      %181 = vmatpush1.msra.mxu0 0.0
      %182 = vmatprep.subr.mxu0 0.0
      %183 = vmatpush1.msra.mxu0 0.0
      %184 = vmatprep.subr.mxu0 0.0
      %185 = vmatpush1.msra.mxu0 0.0
      %186 = vmatprep.subr.mxu0 0.0
      %187 = vmatpush1.msra.mxu0 0.0
      %188 = vmatprep.subr.mxu0 0.0
      %189 = vmatpush1.msra.mxu0 0.0
      %190 = vmatprep.subr.mxu0 0.0
      %191 = vmatpush1.msra.mxu0 0.0
      %192 = vmatprep.subr.mxu0 0.0
      %193 = vmatpush1.msra.mxu0 0.0
      %194 = vmatprep.subr.mxu0 0.0
      %195 = vmatpush1.msra.mxu0 0.0
      %196 = vmatprep.subr.mxu0 0.0
      %197 = vmatpush1.msra.mxu0 0.0
      %198 = vmatprep.subr.mxu0 0.0
      %199 = vmatpush1.msra.mxu0 0.0
      %200 = vmatprep.mubr.f32.mxu0 0.0
      %201 = vmatmul.mubr.f32.gmra.mrb[0].mxu0 %v134
      %v202 = vpop.f32.mrb[0].mxu0
      %v203 = vadd.f32 0.0, %v202
      %v204 = vpop.f32.mrb[0].mxu0
      %205 = vdwg.mxu0
      %v206 = vxor.u32 %v203, 2147483648
      %v207 = vmul.f32 %v206, 1.442695
      %v208 = vpow.pop %v207
      %v209 = vadd.f32 %v208, 1.0
      %v210 = vrcp.pop %v209
      %v211 = vmul.f32 1.0, %v210
      %v214 = vunpack.c.l.s4 1966171168
      %v215 = vunpack.c.0.s8 %v214
      %v216 = vlaneseq
      %v217 = vshrl.u32 %v216, 7
      %v218 = vsub.s32 %v215, %v217
      %v219 = vrot.slane %v211, %v218
      %v220 = vcombine.high %v219, %v219
      %v222 = vunpack.c.l.s4 1966171168
      %v223 = vunpack.c.0.s8 %v222
      %v224 = vlaneseq
      %v225 = vshrl.u32 %v224, 7
      %v226 = vsub.s32 %v223, %v225
      %v227 = vrot.slane %v219, %v226
      %v229 = vunpack.c.l.s4 1966171168
      %v230 = vunpack.c.0.s8 %v229
      %v231 = vlaneseq
      %v232 = vshrl.u32 %v231, 7
      %v233 = vsub.s32 %v230, %v232
      %v234 = vrot.slane %v220, %v233
      %vm237 = vcmask 122880
      %238 = vst.msk [vmem:[#allocation8] sm:$0x1] %vm237, %v227
      %239 = vst.msk [vmem:[#allocation8 + $0x1] sm:$0x1] %vm237, %v234
    $region25: #{tpu_custom_call.1} parent=1 // pred_fallthru
      _
    // Predicated region
    $region26: #{tpu_custom_call.1} parent=1 // pred_check
      _
    $region27: #{tpu_custom_call.1} parent=1 // pred_check_branch
      %241 = sbr.rel (0) target = $region29
    $region28: #{tpu_custom_call.1} parent=1 // pred_region
      %s243 = ssub.s32 32, 32
      %244 = vsyncadd [#allocation5], %s243
      %s245 = sshll.u32 [#allocation8], 4
      %s246 = int_to_ptr.vmem [resolvable:$true] %s245
      %251 = dma.vmem_to_hbm [thread:$0]  %s246, 32, %s2, [#allocation5], 16, 16, 1
    $region29: #{tpu_custom_call.1} parent=1 // pred_fallthru
      _
    // Predicated region
    $region30: #{tpu_custom_call.1} parent=1 // pred_check
      _
    $region31: #{tpu_custom_call.1} parent=1 // pred_check_branch
      %253 = sbr.rel (0) target = $region33
    $region32: #{tpu_custom_call.1} parent=1 // pred_region
      %254 = dma.done [#allocation5], 32
    $region33: #{tpu_custom_call.1} parent=1 // pred_fallthru
      _
    %255 = vsyncpa [#allocation4], 1
    %256 = vsyncpa [#allocation5], 1
    %257 = vsyncpa [#allocation6], 1

</llo_original>
